<compile_context>
chip_gen: v5e
topology: v5e:2x2
jax: 0.10.0
libtpu: 0.0.40
codegen_flags: <defaults>
</compile_context>

<pallas_src>
import functools

import numpy as np
import jax
import jax.numpy as jnp
from jax.experimental import pallas as pl
from jax.experimental.pallas import tpu as pltpu

_BN_EPS = 1e-5


def _round_up(x, m):
    return (x + m - 1) // m * m


# --------------------------------------------------------------------------- #
# Shared per-tile conv: K accumulating (Cout,Cin)@(Cin,TL) MXU matmuls
# --------------------------------------------------------------------------- #
def _conv_tile(w_ref, x_ref, le_ref, re_ref, *, K, lp, TL, L, mask_tail):
    """'same' K-tap conv of one (Cin, TL) tile -> (Cout, TL) float32.

    w_ref:  (K, Cout, Cin) bf16      le_ref/re_ref: (1, 1, Cin, lp/rp) f32 halo cols
    x_ref:  (1, Cin, TL)   f32 tile of x
    """
    xt = x_ref[0]                                                    # (Cin, TL) f32
    if mask_tail:
        # The last tile can extend past L: Pallas only DMAs the in-bounds window,
        # so the tail columns are garbage and must read as zeros ('same' padding)
        # before they feed the shifted taps / statistics.
        col = (jax.lax.broadcasted_iota(jnp.int32, (1, TL), 1)
               + pl.program_id(1) * TL)
        xt = jnp.where(col < L, xt, 0.0)

    y = None
    for k in range(K):
        d = k - lp                                   # tap offset in [-lp, rp]
        if d == 0:
            tap = xt
        elif d < 0:
            # x[l + d]: shift right by |d|; leftmost |d| columns come from the
            # previous tile (zeros at the sequence start).
            ledge = le_ref[0, 0]                                     # (Cin, lp)
            tap = jnp.concatenate([ledge[:, lp + d:], xt[:, :TL + d]], axis=1)
        else:
            # x[l + d]: shift left by d; rightmost d columns come from the next
            # tile (zeros past the sequence end).
            redge = re_ref[0, 0]                                     # (Cin, rp)
            tap = jnp.concatenate([xt[:, d:], redge[:, :d]], axis=1)
        part = jnp.dot(w_ref[k], tap.astype(jnp.bfloat16),
                       preferred_element_type=jnp.float32)           # (Cout, TL) f32
        y = part if y is None else y + part
    return y


# --------------------------------------------------------------------------- #
# Phase 1: conv + per-(n, tile) per-channel BatchNorm partial statistics
# --------------------------------------------------------------------------- #
def _conv_stats_kernel(w_ref, x_ref, le_ref, re_ref, s1_ref, s2_ref,
                       *, K, lp, TL, L, mask_tail):
    y = _conv_tile(w_ref, x_ref, le_ref, re_ref,
                   K=K, lp=lp, TL=TL, L=L, mask_tail=mask_tail)
    if mask_tail:
        col = (jax.lax.broadcasted_iota(jnp.int32, (1, TL), 1)
               + pl.program_id(1) * TL)
        yv = y * (col < L).astype(jnp.float32)
    else:
        yv = y
    # TODO(synk): stat blocks are (Cout, 1) (lane width 1 -> masked stores); a
    # lane-dense (1, Cout) layout would be marginally better but needs a relayout.
    s1_ref[0, 0] = jnp.sum(yv, axis=1, keepdims=True)                # (Cout, 1)
    s2_ref[0, 0] = jnp.sum(yv * y, axis=1, keepdims=True)            # (Cout, 1)


# --------------------------------------------------------------------------- #
# Phase 2: recompute conv, apply folded BN scale/shift + ReLU, store output
# --------------------------------------------------------------------------- #
def _conv_bn_relu_kernel(w_ref, x_ref, le_ref, re_ref, scale_ref, shift_ref, o_ref,
                         *, K, lp, TL, L, mask_tail):
    y = _conv_tile(w_ref, x_ref, le_ref, re_ref,
                   K=K, lp=lp, TL=TL, L=L, mask_tail=mask_tail)
    o_ref[0] = jnp.maximum(y * scale_ref[...] + shift_ref[...], 0.0
                           ).astype(o_ref.dtype)


# --------------------------------------------------------------------------- #
# Wrapper
# --------------------------------------------------------------------------- #
def conv1d_act_norm_forward(x, weight, gamma, beta, *, tile_l=4096):
    """x: (N, Cin, L) f32; weight: (Cout, Cin, K); gamma/beta: (Cout,).
    Returns (N, Cout, L) f32 = ReLU(BatchNorm1d(Conv1d_same(x)))."""
    x = x.astype(jnp.float32)
    N, Cin, L = x.shape
    Cout, Cin_w, K = weight.shape
    assert Cin_w == Cin
    assert K % 2 == 1, "padding='same' path implemented for odd kernel sizes"
    lp = (K - 1) // 2
    rp = K - 1 - lp
    H_l, H_r = max(lp, 1), max(rp, 1)

    # ---- L tiling: large lane-dense tiles (per-grid-step overhead amortized). ----
    tile_l = max(128, _round_up(tile_l, 128))
    if L <= tile_l:
        TL, num_tiles = L, 1                 # single block == full dim (no 128 rule)
    else:
        TL = tile_l                          # multiple of 128
        num_tiles = -(-L // TL)
    # v7x megacore: ensure >= 2 parallel grid points when N == 1.
    if N * num_tiles < 2:
        half = _round_up((L + 1) // 2, 128)
        if half < L:
            TL = half
            num_tiles = -(-L // TL)
    mask_tail = (L % TL) != 0

    # ---- Tiny halo-edge arrays: the lp/rp columns just outside each tile. -------
    starts = np.arange(num_tiles, dtype=np.int64) * TL

    def _edge_cols(idx):                         # idx: (num_tiles, H) static numpy
        valid = (idx >= 0) & (idx < L)
        cols = jnp.asarray(np.clip(idx, 0, L - 1).reshape(-1), dtype=jnp.int32)
        g = jnp.take(x, cols, axis=2)                                  # (N, Cin, T*H)
        g = g.reshape(N, Cin, num_tiles, idx.shape[1]).transpose(0, 2, 1, 3)
        v = jnp.asarray(valid, dtype=jnp.float32)[None, :, None, :]    # (1, T, 1, H)
        return (g * v).astype(jnp.float32)                             # (N, T, Cin, H)

    if lp > 0:
        ledges = _edge_cols(starts[:, None] + np.arange(-lp, 0)[None, :])
    else:
        ledges = jnp.zeros((N, num_tiles, Cin, H_l), jnp.float32)
    if rp > 0:
        redges = _edge_cols(starts[:, None] + TL + np.arange(rp)[None, :])
    else:
        redges = jnp.zeros((N, num_tiles, Cin, H_r), jnp.float32)

    # Weight -> (K, Cout, Cin) bf16 (one (Cout,Cin) slab per tap).
    w = jnp.transpose(weight, (2, 0, 1)).astype(jnp.bfloat16)

    # Shared BlockSpecs.
    w_spec = pl.BlockSpec((K, Cout, Cin), lambda n, i: (0, 0, 0))
    x_spec = pl.BlockSpec((1, Cin, TL), lambda n, i: (n, 0, i))
    le_spec = pl.BlockSpec((1, 1, Cin, H_l), lambda n, i: (n, i, 0, 0))
    re_spec = pl.BlockSpec((1, 1, Cin, H_r), lambda n, i: (n, i, 0, 0))
    stat_spec = pl.BlockSpec((1, 1, Cout, 1), lambda n, i: (n, i, 0, 0))
    params = pltpu.CompilerParams(dimension_semantics=("parallel", "parallel"))

    # ---- Phase 1: BN partial statistics of the conv output (conv never hits HBM).
    kern1 = functools.partial(_conv_stats_kernel,
                              K=K, lp=lp, TL=TL, L=L, mask_tail=mask_tail)
    s1, s2 = pl.pallas_call(
        kern1,
        grid=(N, num_tiles),
        in_specs=[w_spec, x_spec, le_spec, re_spec],
        out_specs=[stat_spec, stat_spec],
        out_shape=[
            jax.ShapeDtypeStruct((N, num_tiles, Cout, 1), jnp.float32),
            jax.ShapeDtypeStruct((N, num_tiles, Cout, 1), jnp.float32),
        ],
        compiler_params=params,
    )(w, x, ledges, redges)

    # ---- Fold training-mode BatchNorm1d (+ affine) into per-channel scale/shift.
    cnt = float(N * L)
    mean = jnp.sum(s1, axis=(0, 1)) / cnt                               # (Cout, 1)
    # Biased variance in f32 (E[y^2] - mean^2, clamped). Adequate for conv outputs;
    # a shifted two-pass variance would be safer if BN precision were critical.
    var = jnp.maximum(jnp.sum(s2, axis=(0, 1)) / cnt - mean * mean, 0.0)
    scale = gamma.reshape(Cout, 1).astype(jnp.float32) * jax.lax.rsqrt(var + _BN_EPS)
    shift = beta.reshape(Cout, 1).astype(jnp.float32) - mean * scale

    # ---- Phase 2: recompute conv, apply scale/shift + ReLU, write (N,Cout,L). ----
    kern2 = functools.partial(_conv_bn_relu_kernel,
                              K=K, lp=lp, TL=TL, L=L, mask_tail=mask_tail)
    out = pl.pallas_call(
        kern2,
        grid=(N, num_tiles),
        in_specs=[w_spec, x_spec, le_spec, re_spec,
                  pl.BlockSpec((Cout, 1), lambda n, i: (0, 0)),
                  pl.BlockSpec((Cout, 1), lambda n, i: (0, 0))],
        out_specs=pl.BlockSpec((1, Cout, TL), lambda n, i: (n, 0, i)),
        out_shape=jax.ShapeDtypeStruct((N, Cout, L), jnp.float32),
        compiler_params=params,
    )(w, x, ledges, redges, scale, shift)
    return out


# --------------------------------------------------------------------------- #
# Pure-JAX reference mirroring the PyTorch forward (f32 end-to-end)
# --------------------------------------------------------------------------- #
def _reference_forward(x, weight, gamma, beta):
    K = weight.shape[-1]
    lp = (K - 1) // 2
    rp = (K - 1) - lp
    y = jax.lax.conv_general_dilated(
        x, weight,
        window_strides=(1,),
        padding=[(lp, rp)],
        dimension_numbers=("NCH", "OIH", "NCH"),
        precision=jax.lax.Precision.HIGHEST,
    )
    mean = jnp.mean(y, axis=(0, 2), keepdims=True)
    var = jnp.mean(jnp.square(y - mean), axis=(0, 2), keepdims=True)
    y = (y - mean) * jax.lax.rsqrt(var + _BN_EPS)
    y = y * gamma.reshape(1, -1, 1) + beta.reshape(1, -1, 1)
    return jnp.maximum(y, 0.0)


def _run_case(key, N, Cin, Cout, L, K, tile_l=4096):
    kx, kw = jax.random.split(key)
    x = jax.random.normal(kx, (N, Cin, L), dtype=jnp.float32)
    weight = jax.random.normal(kw, (Cout, Cin, K), dtype=jnp.float32) * 0.1
    gamma = jnp.linspace(0.5, 1.5, Cout, dtype=jnp.float32)
    beta = jnp.linspace(-0.2, 0.2, Cout, dtype=jnp.float32)

    out = conv1d_act_norm_forward(x, weight, gamma, beta, tile_l=tile_l)
    out = jax.block_until_ready(out)
    ref = _reference_forward(x, weight, gamma, beta)

    assert out.shape == (N, Cout, L), out.shape
    err = float(jnp.max(jnp.abs(out - ref)))
    # Tolerance is set by the bf16 MXU operands (f32 accumulation, f32 BN stats):
    # post-BN values are O(1); bf16 operand rounding gives ~1e-2 worst-case abs error.
    assert err < 5e-2, f"Pallas kernel mismatch vs reference: max|diff|={err}"
    return err


if __name__ == "__main__":
    key = jax.random.PRNGKey(0)
    ks = jax.random.split(key, 4)

    # Small shape consistent with the module: batch=2, in=4, out=8, length=16, K=3.
    _run_case(ks[0], N=2, Cin=4, Cout=8, L=16, K=3)
    # Single big tile (TL = L): the common fast path.
    _run_case(ks[1], N=2, Cin=8, Cout=16, L=1000, K=3)
    # Multi-tile path with a partial tail tile: halo edges, tail masking, partial writeback.
    _run_case(ks[2], N=2, Cin=8, Cout=16, L=1000, K=3, tile_l=256)
    # N == 1: the row is auto-split so both v7x TensorCores get a grid point.
    _run_case(ks[3], N=1, Cin=4, Cout=8, L=640, K=3)

    print("KERNEL_OK")
</pallas_src>

<mosaic_0001>
module attributes {stable_mosaic.version = 11 : i64} {
  func.func @_conv_stats_kernel(%arg0: i32, %arg1: i32, %arg2: memref<3x8x4xbf16, #tpu.memory_space<vmem>>, %arg3: memref<1x4x16xf32, #tpu.memory_space<vmem>>, %arg4: memref<1x1x4x1xf32, #tpu.memory_space<vmem>>, %arg5: memref<1x1x4x1xf32, #tpu.memory_space<vmem>>, %arg6: memref<1x1x8x1xf32, #tpu.memory_space<vmem>>, %arg7: memref<1x1x8x1xf32, #tpu.memory_space<vmem>>) attributes {dimension_semantics = [#tpu.dimension_semantics<parallel>, #tpu.dimension_semantics<parallel>], iteration_bounds = array<i64: 2, 1>, scalar_prefetch = 0 : i64, scratch_operands = 0 : i64, tpu.core_type = #tpu.core_type<tc>, window_params = [{pipeline_mode = #tpu.pipeline_mode<synchronous>, transform_indices = @transform_0, window_bounds = array<i64: 3, 8, 4>}, {transform_indices = @transform_1, window_bounds = array<i64: 1, 4, 16>}, {transform_indices = @transform_2, window_bounds = array<i64: 1, 1, 4, 1>}, {transform_indices = @transform_3, window_bounds = array<i64: 1, 1, 4, 1>}, {transform_indices = @transform_4, window_bounds = array<i64: 1, 1, 8, 1>}, {transform_indices = @transform_5, window_bounds = array<i64: 1, 1, 8, 1>}]} {
    %c0 = arith.constant 0 : index
    %c0_0 = arith.constant 0 : index
    %c0_1 = arith.constant 0 : index
    %0 = vector.load %arg3[%c0, %c0_0, %c0_1] : memref<1x4x16xf32, #tpu.memory_space<vmem>>, vector<1x4x16xf32>
    %1 = vector.shape_cast %0 : vector<1x4x16xf32> to vector<4x16xf32>
    %c0_2 = arith.constant 0 : index
    %c0_3 = arith.constant 0 : index
    %c0_4 = arith.constant 0 : index
    %c0_5 = arith.constant 0 : index
    %2 = vector.load %arg4[%c0_2, %c0_3, %c0_4, %c0_5] : memref<1x1x4x1xf32, #tpu.memory_space<vmem>>, vector<1x1x4x1xf32>
    %3 = vector.shape_cast %2 : vector<1x1x4x1xf32> to vector<4x1xf32>
    %4 = vector.extract_strided_slice %1 {offsets = [0, 0], sizes = [4, 15], strides = [1, 1]} : vector<4x16xf32> to vector<4x15xf32>
    %5 = tpu.concatenate %3, %4 in 1 : vector<4x1xf32>, vector<4x15xf32> -> vector<4x16xf32>
    %c0_6 = arith.constant 0 : index
    %c0_7 = arith.constant 0 : index
    %c0_8 = arith.constant 0 : index
    %6 = vector.load %arg2[%c0_6, %c0_7, %c0_8] : memref<3x8x4xbf16, #tpu.memory_space<vmem>>, vector<1x8x4xbf16>
    %7 = vector.shape_cast %6 : vector<1x8x4xbf16> to vector<8x4xbf16>
    %8 = arith.truncf %5 : vector<4x16xf32> to vector<4x16xbf16>
    %cst = arith.constant dense<0.000000e+00> : vector<8x16xf32>
    %9 = tpu.matmul %7, %8, %cst {dimension_numbers = #tpu.dot_dimension_numbers<[1], [0], [0], [1], [0, 0, 1, 1], [], []>} : vector<8x4xbf16>, vector<4x16xbf16>, vector<8x16xf32> -> vector<8x16xf32>
    %c1 = arith.constant 1 : index
    %c0_9 = arith.constant 0 : index
    %c0_10 = arith.constant 0 : index
    %10 = vector.load %arg2[%c1, %c0_9, %c0_10] : memref<3x8x4xbf16, #tpu.memory_space<vmem>>, vector<1x8x4xbf16>
    %11 = vector.shape_cast %10 : vector<1x8x4xbf16> to vector<8x4xbf16>
    %12 = arith.truncf %1 : vector<4x16xf32> to vector<4x16xbf16>
    %cst_11 = arith.constant dense<0.000000e+00> : vector<8x16xf32>
    %13 = tpu.matmul %11, %12, %cst_11 {dimension_numbers = #tpu.dot_dimension_numbers<[1], [0], [0], [1], [0, 0, 1, 1], [], []>} : vector<8x4xbf16>, vector<4x16xbf16>, vector<8x16xf32> -> vector<8x16xf32>
    %14 = arith.addf %9, %13 : vector<8x16xf32>
    %c0_12 = arith.constant 0 : index
    %c0_13 = arith.constant 0 : index
    %c0_14 = arith.constant 0 : index
    %c0_15 = arith.constant 0 : index
    %15 = vector.load %arg5[%c0_12, %c0_13, %c0_14, %c0_15] : memref<1x1x4x1xf32, #tpu.memory_space<vmem>>, vector<1x1x4x1xf32>
    %16 = vector.shape_cast %15 : vector<1x1x4x1xf32> to vector<4x1xf32>
    %17 = vector.extract_strided_slice %1 {offsets = [0, 1], sizes = [4, 15], strides = [1, 1]} : vector<4x16xf32> to vector<4x15xf32>
    %18 = tpu.concatenate %17, %16 in 1 : vector<4x15xf32>, vector<4x1xf32> -> vector<4x16xf32>
    %c2 = arith.constant 2 : index
    %c0_16 = arith.constant 0 : index
    %c0_17 = arith.constant 0 : index
    %19 = vector.load %arg2[%c2, %c0_16, %c0_17] : memref<3x8x4xbf16, #tpu.memory_space<vmem>>, vector<1x8x4xbf16>
    %20 = vector.shape_cast %19 : vector<1x8x4xbf16> to vector<8x4xbf16>
    %21 = arith.truncf %18 : vector<4x16xf32> to vector<4x16xbf16>
    %cst_18 = arith.constant dense<0.000000e+00> : vector<8x16xf32>
    %22 = tpu.matmul %20, %21, %cst_18 {dimension_numbers = #tpu.dot_dimension_numbers<[1], [0], [0], [1], [0, 0, 1, 1], [], []>} : vector<8x4xbf16>, vector<4x16xbf16>, vector<8x16xf32> -> vector<8x16xf32>
    %23 = arith.addf %14, %22 : vector<8x16xf32>
    %cst_19 = arith.constant dense<0.000000e+00> : vector<8xf32>
    %24 = vector.multi_reduction <add>, %23, %cst_19 [1] : vector<8x16xf32> to vector<8xf32>
    %25 = vector.shape_cast %24 : vector<8xf32> to vector<8x1xf32>
    %c0_20 = arith.constant 0 : index
    %c0_21 = arith.constant 0 : index
    %c0_22 = arith.constant 0 : index
    %c0_23 = arith.constant 0 : index
    %26 = vector.load %arg6[%c0_20, %c0_21, %c0_22, %c0_23] : memref<1x1x8x1xf32, #tpu.memory_space<vmem>>, vector<1x1x8x1xf32>
    %27 = vector.shape_cast %26 : vector<1x1x8x1xf32> to vector<8x1xf32>
    %28 = vector.shape_cast %25 : vector<8x1xf32> to vector<1x1x8x1xf32>
    tpu.vector_store %arg6[%c0_20, %c0_21, %c0_22, %c0_23], %28 {strides = array<i32>} : memref<1x1x8x1xf32, #tpu.memory_space<vmem>>, vector<1x1x8x1xf32>,
    %29 = arith.mulf %23, %23 : vector<8x16xf32>
    %cst_24 = arith.constant dense<0.000000e+00> : vector<8xf32>
    %30 = vector.multi_reduction <add>, %29, %cst_24 [1] : vector<8x16xf32> to vector<8xf32>
    %31 = vector.shape_cast %30 : vector<8xf32> to vector<8x1xf32>
    %c0_25 = arith.constant 0 : index
    %c0_26 = arith.constant 0 : index
    %c0_27 = arith.constant 0 : index
    %c0_28 = arith.constant 0 : index
    %32 = vector.load %arg7[%c0_25, %c0_26, %c0_27, %c0_28] : memref<1x1x8x1xf32, #tpu.memory_space<vmem>>, vector<1x1x8x1xf32>
    %33 = vector.shape_cast %32 : vector<1x1x8x1xf32> to vector<8x1xf32>
    %34 = vector.shape_cast %31 : vector<8x1xf32> to vector<1x1x8x1xf32>
    tpu.vector_store %arg7[%c0_25, %c0_26, %c0_27, %c0_28], %34 {strides = array<i32>} : memref<1x1x8x1xf32, #tpu.memory_space<vmem>>, vector<1x1x8x1xf32>,
    return
  }
  func.func @transform_0(%arg0: i32, %arg1: i32) -> (i32, i32, i32) {
    %c0_i32 = arith.constant 0 : i32
    %c0_i32_0 = arith.constant 0 : i32
    %c0_i32_1 = arith.constant 0 : i32
    %c0_i32_2 = arith.constant 0 : i32
    return %c0_i32, %c0_i32_0, %c0_i32_1 : i32, i32, i32
  }
  func.func @transform_1(%arg0: i32, %arg1: i32) -> (i32, i32, i32) {
    %c0_i32 = arith.constant 0 : i32
    %c0_i32_0 = arith.constant 0 : i32
    return %arg0, %c0_i32, %arg1 : i32, i32, i32
  }
  func.func @transform_2(%arg0: i32, %arg1: i32) -> (i32, i32, i32, i32) {
    %c0_i32 = arith.constant 0 : i32
    %c0_i32_0 = arith.constant 0 : i32
    %c0_i32_1 = arith.constant 0 : i32
    return %arg0, %arg1, %c0_i32, %c0_i32_0 : i32, i32, i32, i32
  }
  func.func @transform_3(%arg0: i32, %arg1: i32) -> (i32, i32, i32, i32) {
    %c0_i32 = arith.constant 0 : i32
    %c0_i32_0 = arith.constant 0 : i32
    %c0_i32_1 = arith.constant 0 : i32
    return %arg0, %arg1, %c0_i32, %c0_i32_0 : i32, i32, i32, i32
  }
  func.func @transform_4(%arg0: i32, %arg1: i32) -> (i32, i32, i32, i32) {
    %c0_i32 = arith.constant 0 : i32
    %c0_i32_0 = arith.constant 0 : i32
    %c0_i32_1 = arith.constant 0 : i32
    return %arg0, %arg1, %c0_i32, %c0_i32_0 : i32, i32, i32, i32
  }
  func.func @transform_5(%arg0: i32, %arg1: i32) -> (i32, i32, i32, i32) {
    %c0_i32 = arith.constant 0 : i32
    %c0_i32_0 = arith.constant 0 : i32
    %c0_i32_1 = arith.constant 0 : i32
    return %arg0, %arg1, %c0_i32, %c0_i32_0 : i32, i32, i32, i32
  }
}

</mosaic_0001>

<llo_original>
// kernel: tpu_custom_call.1
$region0: #{tpu_custom_call.1}
  #allocation0 [shape = 'u32[]', space=smem, size = 0x4, offset = 0x4, fixed_abs, tag = 'smem constant byte address 0x4 - core index']
  #allocation1 [shape = 'u32[72,128]{1,0:T(1,128)}', space=vmem, size = 0x9000, scoped, tag = 'internal scratch']
  %s0 = inlined_call_operand.vmem [shape: bf16[3,8,4], index: 0, kind: input, shape index: {}]
  %s1 = inlined_call_operand.vmem [shape: f32[2,4,16], index: 1, kind: input, shape index: {}]
  %s2 = inlined_call_operand.vmem [shape: f32[2,1,4,1], index: 2, kind: input, shape index: {}]
  %s3 = inlined_call_operand.vmem [shape: f32[2,1,4,1], index: 3, kind: input, shape index: {}]
  %s4 = inlined_call_operand.vmem [shape: f32[2,1,8,1], index: 4, kind: output, shape index: {0}]
  %s5 = inlined_call_operand.vmem [shape: f32[2,1,8,1], index: 5, kind: output, shape index: {1}]
  %6 = xla_tuple %s4, %s5
  %s7 = sld [smem:[#allocation0]]
  $region57: #{tpu_custom_call.1} parent=0
    _
  %s9 = ssub.s32 1, %s7
  %s10 = scalar_select 0, %s9, %s7
  loop: start=0, step=1, limit=4
  $region2: #{tpu_custom_call.1} parent=0 // loop_pre_header
    _
  $region3: #{tpu_custom_call.1} parent=0 // loop_header
    %s12 = sphi 0, %s16
    %p13 = scmp.ge.s32.totalorder %s12, 4
    %s19 = sphi 0, %s31
    %s20 = sphi 0, %s27
    %s21 = sphi 0, %s19
    %s22 = sphi 0, %s20
    %s23 = sphi 0, %s21
    %s24 = sphi 0, %s22
    %s32 = sphi 0, %s32
    %s34 = sphi 0, %s32
    %s35 = sphi 0, %s34
    %s49 = sphi 0, %s35
    %s57 = sphi 0, %s59
    %s60 = sphi 0, %s57
    %s61 = sphi 0, %s60
    %s77 = sphi 0, %s61
    %s85 = sphi 0, %s87
    %s88 = sphi 0, %s85
    %s89 = sphi 0, %s88
    %s105 = sphi 0, %s89
    %s113 = sphi 0, %s115
    %s116 = sphi 0, %s113
    %s117 = sphi 0, %s116
    %s133 = sphi 0, %s117
    %s141 = sphi 0, %s143
    %s144 = sphi 0, %s141
    %s145 = sphi 0, %s144
    %s161 = sphi 0, %s145
    %s169 = sphi 0, %s171
    %s172 = sphi 0, %s169
    %s173 = sphi 0, %s172
    %s189 = sphi 0, %s173
  $region4: #{tpu_custom_call.1} parent=0 // loop_header_branch
    %15 = sbr.rel (%p13) target = $region8
  $region5: #{tpu_custom_call.1} parent=0 // loop_body
    %s17 = ssub.s32 %s12, 1
    %s18 = ssub.s32 %s12, 2
    %s25 = sadd.s32 1, %s20
    %p26 = scmp.ge.s32.totalorder %s25, 1
    %s27 = scalar_select %p26, 0, %s25
    %s28 = sadd.s32 1, %s19
    %s29 = scalar_select %p26, %s28, %s19
    %p30 = scmp.ge.s32.totalorder %s29, 2
    %s31 = scalar_select %p30, 0, %s29
    %s33 = sadd.s32 %s32, 1
    %p36 = scmp.eq.s32.totalorder %s12, 1
    %p37 = scmp.ne.s32.totalorder %s32, %s34
    %p38 = scmp.eq.s32.totalorder %s12, 0
    %p39 = por %p37, %p38
    %p40 = scmp.ne.s32.totalorder %s32, %s34
    %p41 = scmp.eq.s32.totalorder %s17, 1
    %p42 = por %p40, %p41
    %p43 = scmp.ne.s32.totalorder %s34, %s35
    %p44 = scmp.eq.s32.totalorder %s17, 0
    %p45 = por %p43, %p44
    %p46 = scmp.ne.s32.totalorder %s34, %s35
    %p47 = scmp.eq.s32.totalorder %s18, 1
    %p48 = por %p46, %p47
    %p50 = scmp.ne.s32.totalorder %s35, %s49
    %p51 = scmp.eq.s32.totalorder %s18, 0
    %p52 = por %p50, %p51
    %s53 = ssub.s32 %s19, %s31
    %s54 = ssub.s32 %s20, %s27
    %s55 = sor.u32 %s53, %s54
    %p56 = scmp.eq.s32.totalorder %s55, 0
    %s58 = sadd.s32 %s57, 1
    %s59 = scalar_select %p56, %s57, %s58
    %p62 = pneg %p56
    %p63 = scmp.eq.s32.totalorder %s12, 1
    %p64 = por %p62, %p63
    %p65 = scmp.ne.s32.totalorder %s57, %s60
    %p66 = scmp.eq.s32.totalorder %s12, 0
    %p67 = por %p65, %p66
    %p68 = scmp.ne.s32.totalorder %s57, %s60
    %p69 = scmp.eq.s32.totalorder %s17, 1
    %p70 = por %p68, %p69
    %p71 = scmp.ne.s32.totalorder %s60, %s61
    %p72 = scmp.eq.s32.totalorder %s17, 0
    %p73 = por %p71, %p72
    %p74 = scmp.ne.s32.totalorder %s60, %s61
    %p75 = scmp.eq.s32.totalorder %s18, 1
    %p76 = por %p74, %p75
    %p78 = scmp.ne.s32.totalorder %s61, %s77
    %p79 = scmp.eq.s32.totalorder %s18, 0
    %p80 = por %p78, %p79
    %s81 = ssub.s32 %s19, %s31
    %s82 = ssub.s32 %s20, %s27
    %s83 = sor.u32 %s81, %s82
    %p84 = scmp.eq.s32.totalorder %s83, 0
    %s86 = sadd.s32 %s85, 1
    %s87 = scalar_select %p84, %s85, %s86
    %p90 = pneg %p84
    %p91 = scmp.eq.s32.totalorder %s12, 1
    %p92 = por %p90, %p91
    %p93 = scmp.ne.s32.totalorder %s85, %s88
    %p94 = scmp.eq.s32.totalorder %s12, 0
    %p95 = por %p93, %p94
    %p96 = scmp.ne.s32.totalorder %s85, %s88
    %p97 = scmp.eq.s32.totalorder %s17, 1
    %p98 = por %p96, %p97
    %p99 = scmp.ne.s32.totalorder %s88, %s89
    %p100 = scmp.eq.s32.totalorder %s17, 0
    %p101 = por %p99, %p100
    %p102 = scmp.ne.s32.totalorder %s88, %s89
    %p103 = scmp.eq.s32.totalorder %s18, 1
    %p104 = por %p102, %p103
    %p106 = scmp.ne.s32.totalorder %s89, %s105
    %p107 = scmp.eq.s32.totalorder %s18, 0
    %p108 = por %p106, %p107
    %s109 = ssub.s32 %s19, %s31
    %s110 = ssub.s32 %s20, %s27
    %s111 = sor.u32 %s109, %s110
    %p112 = scmp.eq.s32.totalorder %s111, 0
    %s114 = sadd.s32 %s113, 1
    %s115 = scalar_select %p112, %s113, %s114
    %p118 = pneg %p112
    %p119 = scmp.eq.s32.totalorder %s12, 1
    %p120 = por %p118, %p119
    %p121 = scmp.ne.s32.totalorder %s113, %s116
    %p122 = scmp.eq.s32.totalorder %s12, 0
    %p123 = por %p121, %p122
    %p124 = scmp.ne.s32.totalorder %s113, %s116
    %p125 = scmp.eq.s32.totalorder %s17, 1
    %p126 = por %p124, %p125
    %p127 = scmp.ne.s32.totalorder %s116, %s117
    %p128 = scmp.eq.s32.totalorder %s17, 0
    %p129 = por %p127, %p128
    %p130 = scmp.ne.s32.totalorder %s116, %s117
    %p131 = scmp.eq.s32.totalorder %s18, 1
    %p132 = por %p130, %p131
    %p134 = scmp.ne.s32.totalorder %s117, %s133
    %p135 = scmp.eq.s32.totalorder %s18, 0
    %p136 = por %p134, %p135
    %s137 = ssub.s32 %s19, %s31
    %s138 = ssub.s32 %s20, %s27
    %s139 = sor.u32 %s137, %s138
    %p140 = scmp.eq.s32.totalorder %s139, 0
    %s142 = sadd.s32 %s141, 1
    %s143 = scalar_select %p140, %s141, %s142
    %p146 = pneg %p140
    %p147 = scmp.eq.s32.totalorder %s12, 1
    %p148 = por %p146, %p147
    %p149 = scmp.ne.s32.totalorder %s141, %s144
    %p150 = scmp.eq.s32.totalorder %s12, 0
    %p151 = por %p149, %p150
    %p152 = scmp.ne.s32.totalorder %s141, %s144
    %p153 = scmp.eq.s32.totalorder %s17, 1
    %p154 = por %p152, %p153
    %p155 = scmp.ne.s32.totalorder %s144, %s145
    %p156 = scmp.eq.s32.totalorder %s17, 0
    %p157 = por %p155, %p156
    %p158 = scmp.ne.s32.totalorder %s144, %s145
    %p159 = scmp.eq.s32.totalorder %s18, 1
    %p160 = por %p158, %p159
    %p162 = scmp.ne.s32.totalorder %s145, %s161
    %p163 = scmp.eq.s32.totalorder %s18, 0
    %p164 = por %p162, %p163
    %s165 = ssub.s32 %s19, %s31
    %s166 = ssub.s32 %s20, %s27
    %s167 = sor.u32 %s165, %s166
    %p168 = scmp.eq.s32.totalorder %s167, 0
    %s170 = sadd.s32 %s169, 1
    %s171 = scalar_select %p168, %s169, %s170
    %p174 = pneg %p168
    %p175 = scmp.eq.s32.totalorder %s12, 1
    %p176 = por %p174, %p175
    %p177 = scmp.ne.s32.totalorder %s169, %s172
    %p178 = scmp.eq.s32.totalorder %s12, 0
    %p179 = por %p177, %p178
    %p180 = scmp.ne.s32.totalorder %s169, %s172
    %p181 = scmp.eq.s32.totalorder %s17, 1
    %p182 = por %p180, %p181
    %p183 = scmp.ne.s32.totalorder %s172, %s173
    %p184 = scmp.eq.s32.totalorder %s17, 0
    %p185 = por %p183, %p184
    %p186 = scmp.ne.s32.totalorder %s172, %s173
    %p187 = scmp.eq.s32.totalorder %s18, 1
    %p188 = por %p186, %p187
    %p190 = scmp.ne.s32.totalorder %s173, %s189
    %p191 = scmp.eq.s32.totalorder %s18, 0
    %p192 = por %p190, %p191
    %p193 = scmp.le.s32.totalorder 1, %s12
    %p194 = scmp.lt.s32.totalorder %s12, 3
    %p195 = pnand %p193, %p194
    %p196 = pneg %p195
    // Predicated region
    $region9: #{tpu_custom_call.1} parent=5 // pred_check
      _
    $region10: #{tpu_custom_call.1} parent=5 // pred_check_branch
      %198 = sbr.rel (%p195) target = $region12
    $region11: #{tpu_custom_call.1} parent=5 // pred_region
      %s199 = ssub.s32 %s12, 1
      // Predicated region
      $region13: #{tpu_custom_call.1} parent=11 // pred_check
        %p200 = pneg %p45
      $region14: #{tpu_custom_call.1} parent=11 // pred_check_branch
        %202 = sbr.rel (%p200) target = $region16
      $region15: #{tpu_custom_call.1} parent=11 // pred_region
        _
      $region16: #{tpu_custom_call.1} parent=11 // pred_fallthru
        _
    $region12: #{tpu_custom_call.1} parent=5 // pred_fallthru
      _
    %p203 = scmp.lt.s32.totalorder %s12, 2
    // Predicated region
    $region17: #{tpu_custom_call.1} parent=5 // pred_check
      %p204 = pneg %p203
    $region18: #{tpu_custom_call.1} parent=5 // pred_check_branch
      %206 = sbr.rel (%p204) target = $region20
    $region19: #{tpu_custom_call.1} parent=5 // pred_region
      // Predicated region
      $region21: #{tpu_custom_call.1} parent=19 // pred_check
        %p207 = pneg %p67
      $region22: #{tpu_custom_call.1} parent=19 // pred_check_branch
        %209 = sbr.rel (%p207) target = $region24
      $region23: #{tpu_custom_call.1} parent=19 // pred_region
        %p210 = scmp.lt.s32.totalorder %s19, 1
        %s211 = scalar_select %p210, %s19, 1
        %p212 = scmp.lt.s32.totalorder %s20, 0
        %s213 = scalar_select %p212, %s20, 0
        %s214 = sadd.s32 %s213, %s211
        %s215 = smul.addr %s214, 4
        %s216 = scalar_lea.vmem %s1, %s215
      $region24: #{tpu_custom_call.1} parent=19 // pred_fallthru
        _
      // Predicated region
      $region25: #{tpu_custom_call.1} parent=19 // pred_check
        %p217 = pneg %p95
      $region26: #{tpu_custom_call.1} parent=19 // pred_check_branch
        %219 = sbr.rel (%p217) target = $region28
      $region27: #{tpu_custom_call.1} parent=19 // pred_region
        %p220 = scmp.lt.s32.totalorder %s19, 1
        %s221 = scalar_select %p220, %s19, 1
        %p222 = scmp.lt.s32.totalorder %s20, 0
        %s223 = scalar_select %p222, %s20, 0
        %s224 = sadd.s32 %s223, %s221
        %s225 = smul.addr %s224, 4
        %s226 = scalar_lea.vmem %s2, %s225
      $region28: #{tpu_custom_call.1} parent=19 // pred_fallthru
        _
      // Predicated region
      $region29: #{tpu_custom_call.1} parent=19 // pred_check
        %p227 = pneg %p123
      $region30: #{tpu_custom_call.1} parent=19 // pred_check_branch
        %229 = sbr.rel (%p227) target = $region32
      $region31: #{tpu_custom_call.1} parent=19 // pred_region
        %p230 = scmp.lt.s32.totalorder %s19, 1
        %s231 = scalar_select %p230, %s19, 1
        %p232 = scmp.lt.s32.totalorder %s20, 0
        %s233 = scalar_select %p232, %s20, 0
        %s234 = sadd.s32 %s233, %s231
        %s235 = smul.addr %s234, 4
        %s236 = scalar_lea.vmem %s3, %s235
      $region32: #{tpu_custom_call.1} parent=19 // pred_fallthru
        _
    $region20: #{tpu_custom_call.1} parent=5 // pred_fallthru
      _
    %p237 = scmp.le.s32.totalorder 1, %s12
    %p238 = scmp.lt.s32.totalorder %s12, 3
    %p239 = pnand %p237, %p238
    %p240 = pneg %p239
    // Predicated region
    $region33: #{tpu_custom_call.1} parent=5 // pred_check
      _
    $region34: #{tpu_custom_call.1} parent=5 // pred_check_branch
      %242 = sbr.rel (%p239) target = $region36
    $region35: #{tpu_custom_call.1} parent=5 // pred_region
      %s243 = ssub.s32 %s12, 1
      %p244 = pneg %p45
      %p245 = pneg %p42
      %p246 = scmp.lt.s32.totalorder %s21, 1
      %s247 = scalar_select %p246, %s21, 1
      %p248 = scmp.lt.s32.totalorder %s22, 0
      %s249 = scalar_select %p248, %s22, 0
      %s250 = sadd.s32 %s249, %s247
      %s251 = smul.addr %s250, 4
      %s252 = scalar_lea.vmem %s1, %s251
      %p253 = pneg %p73
      %p254 = pneg %p70
      %p255 = scmp.lt.s32.totalorder %s21, 1
      %s256 = scalar_select %p255, %s21, 1
      %p257 = scmp.lt.s32.totalorder %s22, 0
      %s258 = scalar_select %p257, %s22, 0
      %s259 = sadd.s32 %s258, %s256
      %s260 = smul.addr %s259, 4
      %s261 = scalar_lea.vmem %s2, %s260
      %p262 = pneg %p101
      %p263 = pneg %p98
      %p264 = scmp.lt.s32.totalorder %s21, 1
      %s265 = scalar_select %p264, %s21, 1
      %p266 = scmp.lt.s32.totalorder %s22, 0
      %s267 = scalar_select %p266, %s22, 0
      %s268 = sadd.s32 %s267, %s265
      %s269 = smul.addr %s268, 4
      %s270 = scalar_lea.vmem %s3, %s269
      %p271 = pneg %p129
      %p272 = pneg %p126
      %p273 = pneg %p157
      %p274 = pneg %p154
      %p275 = scmp.lt.s32.totalorder %s21, 1
      %s276 = scalar_select %p275, %s21, 1
      %p277 = scmp.lt.s32.totalorder %s22, 0
      %s278 = scalar_select %p277, %s22, 0
      %s279 = sadd.s32 %s278, %s276
      %s280 = smul.addr %s279, 8
      %s281 = scalar_lea.vmem %s4, %s280
      %p282 = pneg %p185
      %p283 = pneg %p182
      %p284 = scmp.lt.s32.totalorder %s21, 1
      %s285 = scalar_select %p284, %s21, 1
      %p286 = scmp.lt.s32.totalorder %s22, 0
      %s287 = scalar_select %p286, %s22, 0
      %s288 = sadd.s32 %s287, %s285
      %s289 = smul.addr %s288, 8
      %s290 = scalar_lea.vmem %s5, %s289
      %p291 = scmp.lt.s32.totalorder %s21, 1
      %s292 = scalar_select %p291, %s21, 1
      %p293 = scmp.lt.s32.totalorder %s22, 0
      %s294 = scalar_select %p293, %s22, 0
      %s295 = sadd.s32 %s294, %s292
      %s296 = smul.addr %s295, 4
      %s297 = scalar_lea.vmem %s1, %s296
      %p298 = scmp.lt.s32.totalorder %s21, 1
      %s299 = scalar_select %p298, %s21, 1
      %p300 = scmp.lt.s32.totalorder %s22, 0
      %s301 = scalar_select %p300, %s22, 0
      %s302 = sadd.s32 %s301, %s299
      %s303 = smul.addr %s302, 4
      %s304 = scalar_lea.vmem %s2, %s303
      %p305 = scmp.lt.s32.totalorder %s21, 1
      %s306 = scalar_select %p305, %s21, 1
      %p307 = scmp.lt.s32.totalorder %s22, 0
      %s308 = scalar_select %p307, %s22, 0
      %s309 = sadd.s32 %s308, %s306
      %s310 = smul.addr %s309, 4
      %s311 = scalar_lea.vmem %s3, %s310
      %p312 = scmp.lt.s32.totalorder %s21, 1
      %s313 = scalar_select %p312, %s21, 1
      %p314 = scmp.lt.s32.totalorder %s22, 0
      %s315 = scalar_select %p314, %s22, 0
      %s316 = sadd.s32 %s315, %s313
      %s317 = smul.addr %s316, 8
      %s318 = scalar_lea.vmem %s4, %s317
      %p319 = scmp.lt.s32.totalorder %s21, 1
      %s320 = scalar_select %p319, %s21, 1
      %p321 = scmp.lt.s32.totalorder %s22, 0
      %s322 = scalar_select %p321, %s22, 0
      %s323 = sadd.s32 %s322, %s320
      %s324 = smul.addr %s323, 8
      %s325 = scalar_lea.vmem %s5, %s324
      %v327 = vld [vmem:[%s297] sm:$0xf]
      %v328 = vld [vmem:[%s304] sm:$0xf]
      %330 = vrot.lane.b32.xlu0 %v327, 1
      %v331 = vpop.permute.xlu0 %330
      %vm333 = vcmask 7168
      %v334 = vsel %vm333, %v328, %v331
      %v335 = vld [vmem:[%s0] sm:$0xf]
      %v336 = vpack.c.bf16 %v334, %v334
      %s337 = scalar_lea.vmem %s0, 4
      %v338 = vld [vmem:[%s337] sm:$0xf]
      %v339 = vpack.c.bf16 %v327, %v327
      %vm340 = vcmask 31744
      %v342 = vsel %vm340, %v338, 0
      %vm344 = vcmask 1041408
      %v346 = vsel %vm344, %v339, 0
      %348 = vmatpush.bf16.msra.mxu0 0
      %349 = vmatpush.bf16.msra.mxu0 0
      %350 = vmatpush.bf16.msra.mxu0 0
      %351 = vmatpush.bf16.msra.mxu0 0
      %352 = vmatpush.bf16.msra.mxu0 0
      %353 = vmatpush.bf16.msra.mxu0 0
      %354 = vmatpush.bf16.msra.mxu0 0
      %355 = vmatpush.bf16.msra.mxu0 %v346
      %356 = vmatmul.bf16.gmra.mxu0 %v342
      %v357 = vpop.f32.mrf.mxu0
      %v358 = vadd.f32 0.0, %v357
      %v359 = vpop.f32.mrf.mxu0
      %360 = vdwg.mxu0
      %v362 = vsel %vm340, %v335, 0
      %v365 = vsel %vm344, %v336, 0
      %367 = vmatpush.bf16.msra.mxu0 0
      %368 = vmatpush.bf16.msra.mxu0 0
      %369 = vmatpush.bf16.msra.mxu0 0
      %370 = vmatpush.bf16.msra.mxu0 0
      %371 = vmatpush.bf16.msra.mxu0 0
      %372 = vmatpush.bf16.msra.mxu0 0
      %373 = vmatpush.bf16.msra.mxu0 0
      %374 = vmatpush.bf16.msra.mxu0 %v365
      %375 = vmatmul.bf16.gmra.mxu0 %v362
      %v376 = vpop.f32.mrf.mxu0
      %v377 = vadd.f32 %v358, %v376
      %v378 = vpop.f32.mrf.mxu0
      %379 = vdwg.mxu0
      %v380 = vld [vmem:[%s311] sm:$0xf]
      %381 = vrot.lane.b32.xlu0 %v327, 127
      %v382 = vpop.permute.xlu0 %381
      %385 = vrot.lane.b32.xlu0 %v380, 15
      %v386 = vpop.permute.xlu0 %385
      %vm388 = vcmask 121856
      %v389 = vsel %vm388, %v382, %v386
      %s390 = scalar_lea.vmem %s0, 8
      %v391 = vld [vmem:[%s390] sm:$0xf]
      %v392 = vpack.c.bf16 %v389, %v389
      %v394 = vsel %vm340, %v391, 0
      %v397 = vsel %vm344, %v392, 0
      %399 = vmatpush.bf16.msra.mxu0 0
      %400 = vmatpush.bf16.msra.mxu0 0
      %401 = vmatpush.bf16.msra.mxu0 0
      %402 = vmatpush.bf16.msra.mxu0 0
      %403 = vmatpush.bf16.msra.mxu0 0
      %404 = vmatpush.bf16.msra.mxu0 0
      %405 = vmatpush.bf16.msra.mxu0 0
      %406 = vmatpush.bf16.msra.mxu0 %v397
      %407 = vmatmul.bf16.gmra.mxu0 %v394
      %v408 = vpop.f32.mrf.mxu0
      %v409 = vadd.f32 0.0, %v408
      %v410 = vpop.f32.mrf.mxu0
      %411 = vdwg.mxu0
      %v412 = vadd.f32 %v377, %v409
      %vm413 = vcmask 130048
      %v414 = vsel %vm413, %v412, 0.0
      %415 = vadd.xlane.f32.xlu0 %v414
      %v416 = vpop.xlane.xlu0 %415
      %417 = vst.msk [vmem:[%s318] sm:$0xff] %vm333, %v416
      %v418 = vmul.f32 %v412, %v412
      %v419 = vsel %vm413, %v418, 0.0
      %420 = vadd.xlane.f32.xlu0 %v419
      %v421 = vpop.xlane.xlu0 %420
      %422 = vst.msk [vmem:[%s325] sm:$0xff] %vm333, %v421
      %p423 = scmp.lt.s32.totalorder %s21, 1
      %s424 = scalar_select %p423, %s21, 1
      %p425 = scmp.lt.s32.totalorder %s22, 0
      %s426 = scalar_select %p425, %s22, 0
      %s427 = sadd.s32 %s426, %s424
      %s428 = smul.addr %s427, 8
      %s429 = scalar_lea.vmem %s4, %s428
      %p430 = scmp.lt.s32.totalorder %s21, 1
      %s431 = scalar_select %p430, %s21, 1
      %p432 = scmp.lt.s32.totalorder %s22, 0
      %s433 = scalar_select %p432, %s22, 0
      %s434 = sadd.s32 %s433, %s431
      %s435 = smul.addr %s434, 8
      %s436 = scalar_lea.vmem %s5, %s435
      // Predicated region
      $region37: #{tpu_custom_call.1} parent=35 // pred_check
        %p437 = pneg %p154
      $region38: #{tpu_custom_call.1} parent=35 // pred_check_branch
        %439 = sbr.rel (%p437) target = $region40
      $region39: #{tpu_custom_call.1} parent=35 // pred_region
        _
      $region40: #{tpu_custom_call.1} parent=35 // pred_fallthru
        _
      // Predicated region
      $region41: #{tpu_custom_call.1} parent=35 // pred_check
        %p440 = pneg %p182
      $region42: #{tpu_custom_call.1} parent=35 // pred_check_branch
        %442 = sbr.rel (%p440) target = $region44
      $region43: #{tpu_custom_call.1} parent=35 // pred_region
        _
      $region44: #{tpu_custom_call.1} parent=35 // pred_fallthru
        _
    $region36: #{tpu_custom_call.1} parent=5 // pred_fallthru
      _
    %p443 = scmp.le.s32.totalorder 2, %s12
    // Predicated region
    $region45: #{tpu_custom_call.1} parent=5 // pred_check
      %p444 = pneg %p443
    $region46: #{tpu_custom_call.1} parent=5 // pred_check_branch
      %446 = sbr.rel (%p444) target = $region48
    $region47: #{tpu_custom_call.1} parent=5 // pred_region
      %s447 = ssub.s32 %s12, 2
      // Predicated region
      $region49: #{tpu_custom_call.1} parent=47 // pred_check
        %p448 = pneg %p160
      $region50: #{tpu_custom_call.1} parent=47 // pred_check_branch
        %450 = sbr.rel (%p448) target = $region52
      $region51: #{tpu_custom_call.1} parent=47 // pred_region
        %p451 = scmp.lt.s32.totalorder %s23, 1
        %s452 = scalar_select %p451, %s23, 1
        %p453 = scmp.lt.s32.totalorder %s24, 0
        %s454 = scalar_select %p453, %s24, 0
        %s455 = sadd.s32 %s454, %s452
        %s456 = smul.addr %s455, 8
        %s457 = scalar_lea.vmem %s4, %s456
      $region52: #{tpu_custom_call.1} parent=47 // pred_fallthru
        _
      // Predicated region
      $region53: #{tpu_custom_call.1} parent=47 // pred_check
        %p458 = pneg %p188
      $region54: #{tpu_custom_call.1} parent=47 // pred_check_branch
        %460 = sbr.rel (%p458) target = $region56
      $region55: #{tpu_custom_call.1} parent=47 // pred_region
        %p461 = scmp.lt.s32.totalorder %s23, 1
        %s462 = scalar_select %p461, %s23, 1
        %p463 = scmp.lt.s32.totalorder %s24, 0
        %s464 = scalar_select %p463, %s24, 0
        %s465 = sadd.s32 %s464, %s462
        %s466 = smul.addr %s465, 8
        %s467 = scalar_lea.vmem %s5, %s466
      $region56: #{tpu_custom_call.1} parent=47 // pred_fallthru
        _
    $region48: #{tpu_custom_call.1} parent=5 // pred_fallthru
      _
  $region6: #{tpu_custom_call.1} parent=0 // loop_footer
    %s16 = sadd.s32 1, %s12
  $region7: #{tpu_custom_call.1} parent=0 // loop_footer_branch
    %11 = sbr.rel target = $region3
  $region8: #{tpu_custom_call.1} parent=0 // loop_exit
    _

</llo_original>
